<compile_context>
chip_gen: v7x
topology: tpu7x:2x2x1
jax: 0.10.0
libtpu: 0.0.40
codegen_flags: <defaults>
</compile_context>

<pallas_src>
import jax
import jax.numpy as jnp
from jax.experimental import pallas as pl
from jax.experimental.pallas import tpu as pltpu

_LANE = 128
_SUBLANE = 8


def _round_up(x, m):
    return ((x + m - 1) // m) * m


# ---------------------------------------------------------------------------
# Kernel: one batch tile -> compact transposed Q slab (8, tb).
# ---------------------------------------------------------------------------
def _critic_kernel(x_ref, w1_ref, b1_ref, w2_ref, b2_ref, wq_ref, bq_ref,
                   out_ref):
    # h1 = relu(x @ W1 + b1)      (f32 accumulate, f32 epilogue)
    h1 = jnp.dot(x_ref[...], w1_ref[...], preferred_element_type=jnp.float32)
    h1 = jnp.maximum(h1 + b1_ref[...], 0.0)

    # h2 = relu(h1 @ W2 + b2)
    h2 = jnp.dot(h1.astype(w2_ref.dtype), w2_ref[...],
                 preferred_element_type=jnp.float32)
    h2 = jnp.maximum(h2 + b2_ref[...], 0.0)

    # Head: single output feature -> VPU multiply + XLU lane reduction (keeps
    # the MXU free for the two real matmuls), then transpose the (tb, 1)
    # column to a lane-dense (1, tb) row and replicate over 8 sublanes so the
    # store is a full-width unmasked vst.
    q = jnp.sum(h2 * wq_ref[...], axis=-1, keepdims=True)        # (tb, 1) f32
    q_row = jnp.transpose(q, (1, 0)) + bq_ref[...]                # (1, tb)
    out_ref[...] = jnp.broadcast_to(q_row, out_ref.shape).astype(out_ref.dtype)


# ---------------------------------------------------------------------------
# Batch-tile selection.
# ---------------------------------------------------------------------------
def _pick_batch_tile(b, row_mult, max_batch_tile):
    """Pick (tb, padded_B).  Multi-step grids use tb % 128 == 0 (lane-dense
    output blocks) with minimal padding and >= 2 steps (v7x megacore);
    small batches use a single full-array tile."""
    if b <= 2 * _LANE:
        tb = _round_up(b, row_mult)
        return tb, tb
    best = None
    for tb in range(_LANE, max(max_batch_tile, _LANE) + 1, _LANE):
        steps = pl.cdiv(b, tb)
        if steps < 2:               # keep >= 2 grid steps for both v7x TCs
            continue
        bp = steps * tb
        key = (bp, steps)           # minimize padding first, then step count
        if best is None or key < best[0]:
            best = (key, tb)
    tb = best[1]
    return tb, pl.cdiv(b, tb) * tb


# ---------------------------------------------------------------------------
# Wrapper: batch-tiled pallas_call with resident (single-buffered) weights.
# ---------------------------------------------------------------------------
def critic_forward(state, action, packed, *, max_batch_tile=1024):
    """Returns q of shape (B, 1), matching Critic.forward(state, action)."""
    assert state.shape[0] == action.shape[0]
    b = state.shape[0]
    in_dim = state.shape[1] + action.shape[1]
    compute_dtype = packed["w1"].dtype
    mpad = packed["w2"].shape[0]
    row_mult = 16 if jnp.dtype(compute_dtype).itemsize < 4 else _SUBLANE

    # Fused layer-1 input: one (B, S+A) operand -> one MXU push / one DMA.
    x = jnp.concatenate([state, action], axis=1).astype(compute_dtype)

    tb, bp = _pick_batch_tile(b, row_mult, max_batch_tile)
    if bp != b:
        # zero rows -> harmless garbage q rows, sliced off below
        x = jnp.pad(x, ((0, bp - b), (0, 0)))
    grid = (bp // tb,)

    weight_keys = ("w1", "b1", "w2", "b2", "wq", "bq")

    # VMEM budget (covers fallback double-buffered weights) + cost hints.
    weight_bytes = sum(int(packed[k].size) * packed[k].dtype.itemsize
                       for k in weight_keys)
    io_bytes = 2 * tb * in_dim * x.dtype.itemsize + 2 * _SUBLANE * tb * 4
    act_bytes = 3 * tb * mpad * 4                    # h1/h2 f32 intermediates
    vmem_need = 2 * weight_bytes + io_bytes + act_bytes + (4 << 20)
    vmem_limit = int(min(max(32 << 20, vmem_need), 128 << 20))

    flops = 2 * bp * mpad * (in_dim + mpad + 1)
    bytes_accessed = (int(x.size) * x.dtype.itemsize + weight_bytes
                      + _SUBLANE * bp * 4)
    cost = pl.CostEstimate(flops=flops, transcendentals=0,
                           bytes_accessed=bytes_accessed)

    def _resident_spec(shape, pipeline_mode):
        index_map = lambda i: (0,) * len(shape)
        if pipeline_mode is None:
            return pl.BlockSpec(shape, index_map)
        return pl.BlockSpec(shape, index_map, pipeline_mode=pipeline_mode)

    def _call(weight_mode):
        in_specs = [pl.BlockSpec((tb, in_dim), lambda i: (i, 0))]
        in_specs += [_resident_spec(packed[k].shape, weight_mode)
                     for k in weight_keys]
        return pl.pallas_call(
            _critic_kernel,
            out_shape=jax.ShapeDtypeStruct((_SUBLANE, bp), jnp.float32),
            grid=grid,
            in_specs=in_specs,
            out_specs=pl.BlockSpec((_SUBLANE, tb), lambda i: (0, i)),
            compiler_params=pltpu.CompilerParams(
                dimension_semantics=("parallel",),
                vmem_limit_bytes=vmem_limit),
            cost_estimate=cost,
        )(x, *(packed[k] for k in weight_keys))

    try:
        # Constant-index weight blocks are fetched once; single-buffer them so
        # they only occupy 1x VMEM (matters for large mid_dim on v7x / v5e).
        q8 = _call(pl.Buffered(1))
    except Exception:
        # pipeline_mode / Buffered(1) unsupported on this jax version:
        # fall back to default double-buffering (identical results).
        q8 = _call(None)

    return q8[0, :b, None]                       # (B, 1)


# ---------------------------------------------------------------------------
# Parameter construction (PyTorch nn.Linear default init) + packing.
# ---------------------------------------------------------------------------
def make_params(key, state_dim, action_dim, mid_dim):
    """PyTorch-layout params: w (out, in), b (out,)."""
    in_dim = state_dim + action_dim
    ks = jax.random.split(key, 3)

    def linear(k, fan_in, fan_out):
        bound = 1.0 / (fan_in ** 0.5)
        kw, kb = jax.random.split(k)
        w = jax.random.uniform(kw, (fan_out, fan_in), jnp.float32, -bound, bound)
        bias = jax.random.uniform(kb, (fan_out,), jnp.float32, -bound, bound)
        return w, bias

    w1, b1 = linear(ks[0], in_dim, mid_dim)
    w2, b2 = linear(ks[1], mid_dim, mid_dim)
    w3, b3 = linear(ks[2], mid_dim, 1)
    return dict(w1=w1, b1=b1, w2=w2, b2=b2, w3=w3, b3=b3)


def pack_params(params, compute_dtype=jnp.bfloat16):
    """One-time transform: transpose to (in, out), zero-pad mid to a multiple
    of 128 (padded lanes stay exactly 0 through bias + ReLU), keep the head
    weight as a single f32 row (VPU path) and biases in f32 (f32 epilogue).
    compute_dtype=bf16 is the MXU fast path (f32 accumulation); pass f32 for
    bit-accurate parity with the f32 reference (bf16 drifts ~1e-2)."""
    mid = params["b1"].shape[0]
    in_dim = params["w1"].shape[1]
    mpad = _round_up(mid, _LANE)

    w1 = jnp.zeros((in_dim, mpad), jnp.float32).at[:, :mid].set(params["w1"].T)
    b1 = jnp.zeros((1, mpad), jnp.float32).at[:, :mid].set(params["b1"][None, :])
    w2 = jnp.zeros((mpad, mpad), jnp.float32).at[:mid, :mid].set(params["w2"].T)
    b2 = jnp.zeros((1, mpad), jnp.float32).at[:, :mid].set(params["b2"][None, :])
    wq = jnp.zeros((1, mpad), jnp.float32).at[0, :mid].set(params["w3"][0])
    bq = params["b3"].reshape(1, 1).astype(jnp.float32)

    return dict(w1=w1.astype(compute_dtype), w2=w2.astype(compute_dtype),
                b1=b1, b2=b2, wq=wq, bq=bq)     # biases/head stay f32


def _reference(state, action, p):
    x = jnp.concatenate([state, action], axis=1)
    h1 = jnp.maximum(x @ p["w1"].T + p["b1"], 0.0)
    h2 = jnp.maximum(h1 @ p["w2"].T + p["b2"], 0.0)
    return h2 @ p["w3"].T + p["b3"]


if __name__ == "__main__":
    key = jax.random.PRNGKey(0)

    # --- small case (single batch tile) --------------------------------------
    batch, state_dim, action_dim, mid_dim = 8, 8, 4, 32
    k_params, k_state, k_action, key = jax.random.split(key, 4)
    params = make_params(k_params, state_dim, action_dim, mid_dim)
    # f32 packing here so the check holds to 1e-5; bf16 is the production path.
    packed = pack_params(params, compute_dtype=jnp.float32)
    state = jax.random.normal(k_state, (batch, state_dim), jnp.float32)
    action = jax.random.normal(k_action, (batch, action_dim), jnp.float32)

    q = critic_forward(state, action, packed)
    jax.block_until_ready(q)
    q_ref = _reference(state, action, params)
    assert q.shape == (batch, 1)
    assert jnp.allclose(q, q_ref, atol=1e-5), (q, q_ref)

    # --- multi-tile case (exercises the compact (8, Bp) output grid) --------
    batch2, state_dim2, action_dim2, mid_dim2 = 300, 24, 8, 160
    k_params2, k_state2, k_action2, key = jax.random.split(key, 4)
    params2 = make_params(k_params2, state_dim2, action_dim2, mid_dim2)
    packed2 = pack_params(params2, compute_dtype=jnp.float32)
    state2 = jax.random.normal(k_state2, (batch2, state_dim2), jnp.float32)
    action2 = jax.random.normal(k_action2, (batch2, action_dim2), jnp.float32)

    q2 = critic_forward(state2, action2, packed2)
    jax.block_until_ready(q2)
    q2_ref = _reference(state2, action2, params2)
    assert q2.shape == (batch2, 1)
    assert jnp.allclose(q2, q2_ref, atol=5e-4), float(
        jnp.max(jnp.abs(q2 - q2_ref)))

    print("KERNEL_OK")
</pallas_src>

<mosaic_0001>
module attributes {stable_mosaic.version = 11 : i64} {
  func.func @_critic_kernel(%arg0: i32, %arg1: memref<8x12xf32, #tpu.memory_space<vmem>>, %arg2: memref<12x128xf32, #tpu.memory_space<vmem>>, %arg3: memref<1x128xf32, #tpu.memory_space<vmem>>, %arg4: memref<128x128xf32, #tpu.memory_space<vmem>>, %arg5: memref<1x128xf32, #tpu.memory_space<vmem>>, %arg6: memref<1x128xf32, #tpu.memory_space<vmem>>, %arg7: memref<1x1xf32, #tpu.memory_space<vmem>>, %arg8: memref<8x8xf32, #tpu.memory_space<vmem>>) attributes {dimension_semantics = [#tpu.dimension_semantics<parallel>], iteration_bounds = array<i64: 1>, scalar_prefetch = 0 : i64, scratch_operands = 0 : i64, tpu.core_type = #tpu.core_type<tc>, window_params = [{transform_indices = @transform_0, window_bounds = array<i64: 8, 12>}, {pipeline_mode = #tpu.pipeline_mode<synchronous>, transform_indices = @transform_1, window_bounds = array<i64: 12, 128>}, {pipeline_mode = #tpu.pipeline_mode<synchronous>, transform_indices = @transform_2, window_bounds = array<i64: 1, 128>}, {pipeline_mode = #tpu.pipeline_mode<synchronous>, transform_indices = @transform_3, window_bounds = array<i64: 128, 128>}, {pipeline_mode = #tpu.pipeline_mode<synchronous>, transform_indices = @transform_4, window_bounds = array<i64: 1, 128>}, {pipeline_mode = #tpu.pipeline_mode<synchronous>, transform_indices = @transform_5, window_bounds = array<i64: 1, 128>}, {pipeline_mode = #tpu.pipeline_mode<synchronous>, transform_indices = @transform_6, window_bounds = array<i64: 1, 1>}, {transform_indices = @transform_7, window_bounds = array<i64: 8, 8>}]} {
    %c0 = arith.constant 0 : index
    %c0_0 = arith.constant 0 : index
    %0 = vector.load %arg1[%c0, %c0_0] : memref<8x12xf32, #tpu.memory_space<vmem>>, vector<8x12xf32>
    %c0_1 = arith.constant 0 : index
    %c0_2 = arith.constant 0 : index
    %1 = vector.load %arg2[%c0_1, %c0_2] : memref<12x128xf32, #tpu.memory_space<vmem>>, vector<12x128xf32>
    %cst = arith.constant dense<0.000000e+00> : vector<8x128xf32>
    %2 = tpu.matmul %0, %1, %cst {dimension_numbers = #tpu.dot_dimension_numbers<[1], [0], [0], [1], [0, 0, 1, 1], [], []>} : vector<8x12xf32>, vector<12x128xf32>, vector<8x128xf32> -> vector<8x128xf32>
    %c0_3 = arith.constant 0 : index
    %c0_4 = arith.constant 0 : index
    %3 = vector.load %arg3[%c0_3, %c0_4] : memref<1x128xf32, #tpu.memory_space<vmem>>, vector<1x128xf32>
    %4 = vector.broadcast %3 : vector<1x128xf32> to vector<8x128xf32>
    %5 = arith.addf %2, %4 : vector<8x128xf32>
    %cst_5 = arith.constant 0.000000e+00 : f32
    %6 = vector.broadcast %cst_5 : f32 to vector<8x128xf32>
    %7 = arith.maximumf %5, %6 : vector<8x128xf32>
    %c0_6 = arith.constant 0 : index
    %c0_7 = arith.constant 0 : index
    %8 = vector.load %arg4[%c0_6, %c0_7] : memref<128x128xf32, #tpu.memory_space<vmem>>, vector<128x128xf32>
    %cst_8 = arith.constant dense<0.000000e+00> : vector<8x128xf32>
    %9 = tpu.matmul %7, %8, %cst_8 {dimension_numbers = #tpu.dot_dimension_numbers<[1], [0], [0], [1], [0, 0, 1, 1], [], []>} : vector<8x128xf32>, vector<128x128xf32>, vector<8x128xf32> -> vector<8x128xf32>
    %c0_9 = arith.constant 0 : index
    %c0_10 = arith.constant 0 : index
    %10 = vector.load %arg5[%c0_9, %c0_10] : memref<1x128xf32, #tpu.memory_space<vmem>>, vector<1x128xf32>
    %11 = vector.broadcast %10 : vector<1x128xf32> to vector<8x128xf32>
    %12 = arith.addf %9, %11 : vector<8x128xf32>
    %cst_11 = arith.constant 0.000000e+00 : f32
    %13 = vector.broadcast %cst_11 : f32 to vector<8x128xf32>
    %14 = arith.maximumf %12, %13 : vector<8x128xf32>
    %c0_12 = arith.constant 0 : index
    %c0_13 = arith.constant 0 : index
    %15 = vector.load %arg6[%c0_12, %c0_13] : memref<1x128xf32, #tpu.memory_space<vmem>>, vector<1x128xf32>
    %16 = vector.broadcast %15 : vector<1x128xf32> to vector<8x128xf32>
    %17 = arith.mulf %14, %16 : vector<8x128xf32>
    %cst_14 = arith.constant dense<0.000000e+00> : vector<8xf32>
    %18 = vector.multi_reduction <add>, %17, %cst_14 [1] : vector<8x128xf32> to vector<8xf32>
    %19 = vector.shape_cast %18 : vector<8xf32> to vector<8x1xf32>
    %20 = tpu.transpose %19, [1, 0] : vector<8x1xf32> -> vector<1x8xf32>
    %c0_15 = arith.constant 0 : index
    %c0_16 = arith.constant 0 : index
    %21 = vector.load %arg7[%c0_15, %c0_16] : memref<1x1xf32, #tpu.memory_space<vmem>>, vector<1x1xf32>
    %22 = vector.broadcast %21 : vector<1x1xf32> to vector<1x8xf32>
    %23 = arith.addf %20, %22 : vector<1x8xf32>
    %24 = vector.shape_cast %23 : vector<1x8xf32> to vector<1x8xf32>
    %25 = vector.broadcast %24 : vector<1x8xf32> to vector<8x8xf32>
    %c0_17 = arith.constant 0 : index
    %c0_18 = arith.constant 0 : index
    %26 = vector.load %arg8[%c0_17, %c0_18] : memref<8x8xf32, #tpu.memory_space<vmem>>, vector<8x8xf32>
    tpu.vector_store %arg8[%c0_17, %c0_18], %25 {strides = array<i32>} : memref<8x8xf32, #tpu.memory_space<vmem>>, vector<8x8xf32>,
    return
  }
  func.func @transform_0(%arg0: i32) -> (i32, i32) {
    %c0_i32 = arith.constant 0 : i32
    %c0_i32_0 = arith.constant 0 : i32
    return %arg0, %c0_i32 : i32, i32
  }
  func.func @transform_1(%arg0: i32) -> (i32, i32) {
    %c0_i32 = arith.constant 0 : i32
    %c0_i32_0 = arith.constant 0 : i32
    %c0_i32_1 = arith.constant 0 : i32
    return %c0_i32, %c0_i32_0 : i32, i32
  }
  func.func @transform_2(%arg0: i32) -> (i32, i32) {
    %c0_i32 = arith.constant 0 : i32
    %c0_i32_0 = arith.constant 0 : i32
    %c0_i32_1 = arith.constant 0 : i32
    return %c0_i32, %c0_i32_0 : i32, i32
  }
  func.func @transform_3(%arg0: i32) -> (i32, i32) {
    %c0_i32 = arith.constant 0 : i32
    %c0_i32_0 = arith.constant 0 : i32
    %c0_i32_1 = arith.constant 0 : i32
    return %c0_i32, %c0_i32_0 : i32, i32
  }
  func.func @transform_4(%arg0: i32) -> (i32, i32) {
    %c0_i32 = arith.constant 0 : i32
    %c0_i32_0 = arith.constant 0 : i32
    %c0_i32_1 = arith.constant 0 : i32
    return %c0_i32, %c0_i32_0 : i32, i32
  }
  func.func @transform_5(%arg0: i32) -> (i32, i32) {
    %c0_i32 = arith.constant 0 : i32
    %c0_i32_0 = arith.constant 0 : i32
    %c0_i32_1 = arith.constant 0 : i32
    return %c0_i32, %c0_i32_0 : i32, i32
  }
  func.func @transform_6(%arg0: i32) -> (i32, i32) {
    %c0_i32 = arith.constant 0 : i32
    %c0_i32_0 = arith.constant 0 : i32
    %c0_i32_1 = arith.constant 0 : i32
    return %c0_i32, %c0_i32_0 : i32, i32
  }
  func.func @transform_7(%arg0: i32) -> (i32, i32) {
    %c0_i32 = arith.constant 0 : i32
    %c0_i32_0 = arith.constant 0 : i32
    return %c0_i32, %arg0 : i32, i32
  }
}

module attributes {stable_mosaic.version = 11 : i64} {
  func.func @_critic_kernel(%arg0: i32, %arg1: memref<8x12xf32, #tpu.memory_space<vmem>>, %arg2: memref<12x128xf32, #tpu.memory_space<vmem>>, %arg3: memref<1x128xf32, #tpu.memory_space<vmem>>, %arg4: memref<128x128xf32, #tpu.memory_space<vmem>>, %arg5: memref<1x128xf32, #tpu.memory_space<vmem>>, %arg6: memref<1x128xf32, #tpu.memory_space<vmem>>, %arg7: memref<1x1xf32, #tpu.memory_space<vmem>>, %arg8: memref<8x8xf32, #tpu.memory_space<vmem>>) attributes {dimension_semantics = [#tpu.dimension_semantics<parallel>], iteration_bounds = array<i64: 1>, scalar_prefetch = 0 : i64, scratch_operands = 0 : i64, tpu.core_type = #tpu.core_type<tc>, window_params = [{transform_indices = @transform_0, window_bounds = array<i64: 8, 12>}, {pipeline_mode = #tpu.pipeline_mode<synchronous>, transform_indices = @transform_1, window_bounds = array<i64: 12, 128>}, {pipeline_mode = #tpu.pipeline_mode<synchronous>, transform_indices = @transform_2, window_bounds = array<i64: 1, 128>}, {pipeline_mode = #tpu.pipeline_mode<synchronous>, transform_indices = @transform_3, window_bounds = array<i64: 128, 128>}, {pipeline_mode = #tpu.pipeline_mode<synchronous>, transform_indices = @transform_4, window_bounds = array<i64: 1, 128>}, {pipeline_mode = #tpu.pipeline_mode<synchronous>, transform_indices = @transform_5, window_bounds = array<i64: 1, 128>}, {pipeline_mode = #tpu.pipeline_mode<synchronous>, transform_indices = @transform_6, window_bounds = array<i64: 1, 1>}, {transform_indices = @transform_7, window_bounds = array<i64: 8, 8>}]} {
    %c0 = arith.constant 0 : index
    %c0_0 = arith.constant 0 : index
    %0 = vector.load %arg1[%c0, %c0_0] : memref<8x12xf32, #tpu.memory_space<vmem>>, vector<8x12xf32>
    %c0_1 = arith.constant 0 : index
    %c0_2 = arith.constant 0 : index
    %1 = vector.load %arg2[%c0_1, %c0_2] : memref<12x128xf32, #tpu.memory_space<vmem>>, vector<12x128xf32>
    %cst = arith.constant dense<0.000000e+00> : vector<8x128xf32>
    %2 = tpu.matmul %0, %1, %cst {dimension_numbers = #tpu.dot_dimension_numbers<[1], [0], [0], [1], [0, 0, 1, 1], [], []>} : vector<8x12xf32>, vector<12x128xf32>, vector<8x128xf32> -> vector<8x128xf32>
    %c0_3 = arith.constant 0 : index
    %c0_4 = arith.constant 0 : index
    %3 = vector.load %arg3[%c0_3, %c0_4] : memref<1x128xf32, #tpu.memory_space<vmem>>, vector<1x128xf32>
    %4 = vector.broadcast %3 : vector<1x128xf32> to vector<8x128xf32>
    %5 = arith.addf %2, %4 : vector<8x128xf32>
    %cst_5 = arith.constant 0.000000e+00 : f32
    %6 = vector.broadcast %cst_5 : f32 to vector<8x128xf32>
    %7 = arith.maximumf %5, %6 : vector<8x128xf32>
    %c0_6 = arith.constant 0 : index
    %c0_7 = arith.constant 0 : index
    %8 = vector.load %arg4[%c0_6, %c0_7] : memref<128x128xf32, #tpu.memory_space<vmem>>, vector<128x128xf32>
    %cst_8 = arith.constant dense<0.000000e+00> : vector<8x128xf32>
    %9 = tpu.matmul %7, %8, %cst_8 {dimension_numbers = #tpu.dot_dimension_numbers<[1], [0], [0], [1], [0, 0, 1, 1], [], []>} : vector<8x128xf32>, vector<128x128xf32>, vector<8x128xf32> -> vector<8x128xf32>
    %c0_9 = arith.constant 0 : index
    %c0_10 = arith.constant 0 : index
    %10 = vector.load %arg5[%c0_9, %c0_10] : memref<1x128xf32, #tpu.memory_space<vmem>>, vector<1x128xf32>
    %11 = vector.broadcast %10 : vector<1x128xf32> to vector<8x128xf32>
    %12 = arith.addf %9, %11 : vector<8x128xf32>
    %cst_11 = arith.constant 0.000000e+00 : f32
    %13 = vector.broadcast %cst_11 : f32 to vector<8x128xf32>
    %14 = arith.maximumf %12, %13 : vector<8x128xf32>
    %c0_12 = arith.constant 0 : index
    %c0_13 = arith.constant 0 : index
    %15 = vector.load %arg6[%c0_12, %c0_13] : memref<1x128xf32, #tpu.memory_space<vmem>>, vector<1x128xf32>
    %16 = vector.broadcast %15 : vector<1x128xf32> to vector<8x128xf32>
    %17 = arith.mulf %14, %16 : vector<8x128xf32>
    %cst_14 = arith.constant dense<0.000000e+00> : vector<8xf32>
    %18 = vector.multi_reduction <add>, %17, %cst_14 [1] : vector<8x128xf32> to vector<8xf32>
    %19 = vector.shape_cast %18 : vector<8xf32> to vector<8x1xf32>
    %20 = tpu.transpose %19, [1, 0] : vector<8x1xf32> -> vector<1x8xf32>
    %c0_15 = arith.constant 0 : index
    %c0_16 = arith.constant 0 : index
    %21 = vector.load %arg7[%c0_15, %c0_16] : memref<1x1xf32, #tpu.memory_space<vmem>>, vector<1x1xf32>
    %22 = vector.broadcast %21 : vector<1x1xf32> to vector<1x8xf32>
    %23 = arith.addf %20, %22 : vector<1x8xf32>
    %24 = vector.shape_cast %23 : vector<1x8xf32> to vector<1x8xf32>
    %25 = vector.broadcast %24 : vector<1x8xf32> to vector<8x8xf32>
    %c0_17 = arith.constant 0 : index
    %c0_18 = arith.constant 0 : index
    %26 = vector.load %arg8[%c0_17, %c0_18] : memref<8x8xf32, #tpu.memory_space<vmem>>, vector<8x8xf32>
    tpu.vector_store %arg8[%c0_17, %c0_18], %25 {strides = array<i32>} : memref<8x8xf32, #tpu.memory_space<vmem>>, vector<8x8xf32>,
    return
  }
  func.func @transform_0(%arg0: i32) -> (i32, i32) {
    %c0_i32 = arith.constant 0 : i32
    %c0_i32_0 = arith.constant 0 : i32
    return %arg0, %c0_i32 : i32, i32
  }
  func.func @transform_1(%arg0: i32) -> (i32, i32) {
    %c0_i32 = arith.constant 0 : i32
    %c0_i32_0 = arith.constant 0 : i32
    %c0_i32_1 = arith.constant 0 : i32
    return %c0_i32, %c0_i32_0 : i32, i32
  }
  func.func @transform_2(%arg0: i32) -> (i32, i32) {
    %c0_i32 = arith.constant 0 : i32
    %c0_i32_0 = arith.constant 0 : i32
    %c0_i32_1 = arith.constant 0 : i32
    return %c0_i32, %c0_i32_0 : i32, i32
  }
  func.func @transform_3(%arg0: i32) -> (i32, i32) {
    %c0_i32 = arith.constant 0 : i32
    %c0_i32_0 = arith.constant 0 : i32
    %c0_i32_1 = arith.constant 0 : i32
    return %c0_i32, %c0_i32_0 : i32, i32
  }
  func.func @transform_4(%arg0: i32) -> (i32, i32) {
    %c0_i32 = arith.constant 0 : i32
    %c0_i32_0 = arith.constant 0 : i32
    %c0_i32_1 = arith.constant 0 : i32
    return %c0_i32, %c0_i32_0 : i32, i32
  }
  func.func @transform_5(%arg0: i32) -> (i32, i32) {
    %c0_i32 = arith.constant 0 : i32
    %c0_i32_0 = arith.constant 0 : i32
    %c0_i32_1 = arith.constant 0 : i32
    return %c0_i32, %c0_i32_0 : i32, i32
  }
  func.func @transform_6(%arg0: i32) -> (i32, i32) {
    %c0_i32 = arith.constant 0 : i32
    %c0_i32_0 = arith.constant 0 : i32
    %c0_i32_1 = arith.constant 0 : i32
    return %c0_i32, %c0_i32_0 : i32, i32
  }
  func.func @transform_7(%arg0: i32) -> (i32, i32) {
    %c0_i32 = arith.constant 0 : i32
    %c0_i32_0 = arith.constant 0 : i32
    return %c0_i32, %arg0 : i32, i32
  }
}

</mosaic_0001>

<llo_original>
// kernel: tpu_custom_call.1
$region0: #{tpu_custom_call.1}
  #allocation0 [shape = 'u32[]', space=smem, size = 0x4, offset = 0x4, fixed_abs, tag = 'smem constant byte address 0x4 - core index']
  #allocation1 [shape = 'u32[144,128]{1,0:T(1,128)}', space=vmem, size = 0x12000, scoped, tag = 'internal scratch']
  #allocation2 [shape = 'f32[1,1]{1,0:T(1,128)S(1)}', space=vmem, size = 0x200, scoped, tag = 'scoped memory for tpu_custom_call.1']
  %s0 = inlined_call_operand.hbm [shape: f32[8,12], index: 0, kind: input, shape index: {}]
  %s1 = inlined_call_operand.hbm [shape: f32[12,128], index: 1, kind: input, shape index: {}]
  %s2 = inlined_call_operand.vmem [shape: f32[1,128], index: 2, kind: input, shape index: {}]
  %s3 = inlined_call_operand.hbm [shape: f32[128,128], index: 3, kind: input, shape index: {}]
  %s4 = inlined_call_operand.vmem [shape: f32[1,128], index: 4, kind: input, shape index: {}]
  %s5 = inlined_call_operand.vmem [shape: f32[1,128], index: 5, kind: input, shape index: {}]
  %s6 = inlined_call_operand.<no memory space> [shape: f32[1,1], index: 6, kind: input, shape index: {}]
  %s7 = inlined_call_operand.hbm [shape: f32[8,8], index: 7, kind: output, shape index: {}]
  %s8 = sld [smem:[#allocation0]]
  $region50: #{tpu_custom_call.1} parent=0
    _
  %s10 = ssub.s32 1, %s8
  %s11 = scalar_select 0, %s10, %s8
  %v12 = vstv %s6
  %13 = vst [vmem:[#allocation2] sm:$0x1] %v12
  $region1: #{tpu_custom_call.1} parent=0
    #allocation3 [shape = 'u8[4096]{0}', space=vmem, size = 0x1000, scoped, tag = 'input window, operand 0, single buffered']
    #allocation4 [shape = 's32[1]{0}', space=sflag, size = 0x4, scoped, tag = 'scoped memory for tpu_custom_call.1']
    #allocation5 [shape = 's32[1]{0}', space=sflag, size = 0x4, scoped, tag = 'scoped memory for tpu_custom_call.1']
    #allocation6 [shape = 'u8[8192]{0}', space=vmem, size = 0x2000, scoped, tag = 'input window, operand 1, single buffered']
    #allocation7 [shape = 's32[1]{0}', space=sflag, size = 0x4, scoped, tag = 'scoped memory for tpu_custom_call.1']
    #allocation8 [shape = 'u8[65536]{0}', space=vmem, size = 0x10000, scoped, tag = 'input window, operand 3, single buffered']
    #allocation9 [shape = 'u8[4096]{0}', space=vmem, size = 0x1000, scoped, tag = 'output window, operand 0, single buffered']
    %14 = vsyncpa [#allocation4], 0
    %15 = vsyncpa [#allocation7], 0
    %16 = vsyncpa [#allocation5], 0
    // Predicated region
    $region2: #{tpu_custom_call.1} parent=1 // pred_check
      _
    $region3: #{tpu_custom_call.1} parent=1 // pred_check_branch
      %18 = sbr.rel (0) target = $region5
    $region4: #{tpu_custom_call.1} parent=1 // pred_region
      %s20 = ssub.s32 128, 128
      %21 = vsyncadd [#allocation4], %s20
      %s23 = sshll.u32 [#allocation3], 4
      %s24 = int_to_ptr.vmem [resolvable:$true] %s23
      %26 = dma.hbm_to_vmem [thread:$0]  %s0, 128, %s24, [#allocation4]
    $region5: #{tpu_custom_call.1} parent=1 // pred_fallthru
      _
    // Predicated region
    $region6: #{tpu_custom_call.1} parent=1 // pred_check
      _
    $region7: #{tpu_custom_call.1} parent=1 // pred_check_branch
      %28 = sbr.rel (0) target = $region9
    $region8: #{tpu_custom_call.1} parent=1 // pred_region
      %s30 = ssub.s32 256, 256
      %31 = vsyncadd [#allocation7], %s30
      %s32 = sshll.u32 [#allocation6], 4
      %s33 = int_to_ptr.vmem [resolvable:$true] %s32
      %38 = dma.hbm_to_vmem [thread:$0]  %s1, 256, %s33, [#allocation7], 128, 128, 8
    $region9: #{tpu_custom_call.1} parent=1 // pred_fallthru
      _
    // Predicated region
    $region10: #{tpu_custom_call.1} parent=1 // pred_check
      _
    $region11: #{tpu_custom_call.1} parent=1 // pred_check_branch
      %40 = sbr.rel (0) target = $region13
    $region12: #{tpu_custom_call.1} parent=1 // pred_region
      _
    $region13: #{tpu_custom_call.1} parent=1 // pred_fallthru
      _
    // Predicated region
    $region14: #{tpu_custom_call.1} parent=1 // pred_check
      _
    $region15: #{tpu_custom_call.1} parent=1 // pred_check_branch
      %42 = sbr.rel (0) target = $region17
    $region16: #{tpu_custom_call.1} parent=1 // pred_region
      %s44 = ssub.s32 2048, 2048
      %45 = vsyncadd [#allocation7], %s44
      %s46 = sshll.u32 [#allocation8], 4
      %s47 = int_to_ptr.vmem [resolvable:$true] %s46
      %52 = dma.hbm_to_vmem [thread:$0]  %s3, 2048, %s47, [#allocation7], 128, 128, 8
    $region17: #{tpu_custom_call.1} parent=1 // pred_fallthru
      _
    // Predicated region
    $region18: #{tpu_custom_call.1} parent=1 // pred_check
      _
    $region19: #{tpu_custom_call.1} parent=1 // pred_check_branch
      %54 = sbr.rel (0) target = $region21
    $region20: #{tpu_custom_call.1} parent=1 // pred_region
      _
    $region21: #{tpu_custom_call.1} parent=1 // pred_fallthru
      _
    // Predicated region
    $region22: #{tpu_custom_call.1} parent=1 // pred_check
      _
    $region23: #{tpu_custom_call.1} parent=1 // pred_check_branch
      %56 = sbr.rel (0) target = $region25
    $region24: #{tpu_custom_call.1} parent=1 // pred_region
      _
    $region25: #{tpu_custom_call.1} parent=1 // pred_fallthru
      _
    // Predicated region
    $region26: #{tpu_custom_call.1} parent=1 // pred_check
      _
    $region27: #{tpu_custom_call.1} parent=1 // pred_check_branch
      %58 = sbr.rel (0) target = $region29
    $region28: #{tpu_custom_call.1} parent=1 // pred_region
      _
    $region29: #{tpu_custom_call.1} parent=1 // pred_fallthru
      _
    // Predicated region
    $region30: #{tpu_custom_call.1} parent=1 // pred_check
      _
    $region31: #{tpu_custom_call.1} parent=1 // pred_check_branch
      %60 = sbr.rel (0) target = $region33
    $region32: #{tpu_custom_call.1} parent=1 // pred_region
      %61 = dma.done [#allocation4], 128
    $region33: #{tpu_custom_call.1} parent=1 // pred_fallthru
      _
    // Predicated region
    $region34: #{tpu_custom_call.1} parent=1 // pred_check
      _
    $region35: #{tpu_custom_call.1} parent=1 // pred_check_branch
      %63 = sbr.rel (0) target = $region37
    $region36: #{tpu_custom_call.1} parent=1 // pred_region
      %64 = dma.done [#allocation7], 256
    $region37: #{tpu_custom_call.1} parent=1 // pred_fallthru
      _
    // Predicated region
    $region38: #{tpu_custom_call.1} parent=1 // pred_check
      _
    $region39: #{tpu_custom_call.1} parent=1 // pred_check_branch
      %66 = sbr.rel (0) target = $region41
    $region40: #{tpu_custom_call.1} parent=1 // pred_region
      %67 = dma.done [#allocation7], 2048
    $region41: #{tpu_custom_call.1} parent=1 // pred_fallthru
      _
    %v68 = vld [vmem:[#allocation3] sm:$0xff]
    %v69 = vld [vmem:[#allocation6] sm:$0xff]
    %v70 = vld [vmem:[#allocation6 + $0x8] sm:$0xf]
    %v71 = vld [vmem:[%s2] sm:$0x1]
    %v73 = vlaneseq
    %v74 = vshrl.u32 %v73, 7
    %v75 = vsub.s32 0, %v74
    %v76 = vrot.slane %v71, %v75
    %vm78 = vcmask 97280
    %v80 = vsel %vm78, %v68, 0
    %vm82 = vcmask 1043456
    %v84 = vsel %vm82, %v70, 0
    %86 = vmatprep.subr.mxu0 0.0
    %87 = vmatpush1.msra.mxu0 %v69
    %88 = vmatprep.subr.mxu0 0.0
    %89 = vmatpush1.msra.mxu0 %v84
    %90 = vmatprep.subr.mxu0 0.0
    %91 = vmatpush1.msra.mxu0 0.0
    %92 = vmatprep.subr.mxu0 0.0
    %93 = vmatpush1.msra.mxu0 0.0
    %94 = vmatprep.subr.mxu0 0.0
    %95 = vmatpush1.msra.mxu0 0.0
    %96 = vmatprep.subr.mxu0 0.0
    %97 = vmatpush1.msra.mxu0 0.0
    %98 = vmatprep.subr.mxu0 0.0
    %99 = vmatpush1.msra.mxu0 0.0
    %100 = vmatprep.subr.mxu0 0.0
    %101 = vmatpush1.msra.mxu0 0.0
    %102 = vmatprep.subr.mxu0 0.0
    %103 = vmatpush1.msra.mxu0 0.0
    %104 = vmatprep.subr.mxu0 0.0
    %105 = vmatpush1.msra.mxu0 0.0
    %106 = vmatprep.subr.mxu0 0.0
    %107 = vmatpush1.msra.mxu0 0.0
    %108 = vmatprep.subr.mxu0 0.0
    %109 = vmatpush1.msra.mxu0 0.0
    %110 = vmatprep.subr.mxu0 0.0
    %111 = vmatpush1.msra.mxu0 0.0
    %112 = vmatprep.subr.mxu0 0.0
    %113 = vmatpush1.msra.mxu0 0.0
    %114 = vmatprep.subr.mxu0 0.0
    %115 = vmatpush1.msra.mxu0 0.0
    %116 = vmatprep.subr.mxu0 0.0
    %117 = vmatpush1.msra.mxu0 0.0
    %118 = vmatprep.subr.mxu0 0.0
    %119 = vmatpush1.msra.mxu0 0.0
    %120 = vmatprep.subr.mxu0 0.0
    %121 = vmatpush1.msra.mxu0 0.0
    %122 = vmatprep.subr.mxu0 0.0
    %123 = vmatpush1.msra.mxu0 0.0
    %124 = vmatprep.subr.mxu0 0.0
    %125 = vmatpush1.msra.mxu0 0.0
    %126 = vmatprep.subr.mxu0 0.0
    %127 = vmatpush1.msra.mxu0 0.0
    %128 = vmatprep.subr.mxu0 0.0
    %129 = vmatpush1.msra.mxu0 0.0
    %130 = vmatprep.subr.mxu0 0.0
    %131 = vmatpush1.msra.mxu0 0.0
    %132 = vmatprep.subr.mxu0 0.0
    %133 = vmatpush1.msra.mxu0 0.0
    %134 = vmatprep.subr.mxu0 0.0
    %135 = vmatpush1.msra.mxu0 0.0
    %136 = vmatprep.subr.mxu0 0.0
    %137 = vmatpush1.msra.mxu0 0.0
    %138 = vmatprep.subr.mxu0 0.0
    %139 = vmatpush1.msra.mxu0 0.0
    %140 = vmatprep.subr.mxu0 0.0
    %141 = vmatpush1.msra.mxu0 0.0
    %142 = vmatprep.subr.mxu0 0.0
    %143 = vmatpush1.msra.mxu0 0.0
    %144 = vmatprep.subr.mxu0 0.0
    %145 = vmatpush1.msra.mxu0 0.0
    %146 = vmatprep.subr.mxu0 0.0
    %147 = vmatpush1.msra.mxu0 0.0
    %148 = vmatprep.subr.mxu0 0.0
    %149 = vmatpush1.msra.mxu0 0.0
    %150 = vmatprep.mubr.f32.mxu0 0.0
    %151 = vmatmul.mubr.f32.gmra.mrb[0].mxu0 %v80
    %v152 = vpop.f32.mrb[0].mxu0
    %v153 = vadd.f32 %v76, %v152
    %v154 = vpop.f32.mrb[0].mxu0
    %155 = vdwg.mxu0
    %v156 = vmax.f32 %v153, 0.0
    %v157 = vld [vmem:[#allocation8] sm:$0xff]
    %v158 = vld [vmem:[#allocation8 + $0x8] sm:$0xff]
    %v159 = vld [vmem:[#allocation8 + $0x10] sm:$0xff]
    %v160 = vld [vmem:[#allocation8 + $0x18] sm:$0xff]
    %v161 = vld [vmem:[#allocation8 + $0x20] sm:$0xff]
    %v162 = vld [vmem:[#allocation8 + $0x28] sm:$0xff]
    %v163 = vld [vmem:[#allocation8 + $0x30] sm:$0xff]
    %v164 = vld [vmem:[#allocation8 + $0x38] sm:$0xff]
    %v165 = vld [vmem:[#allocation8 + $0x40] sm:$0xff]
    %v166 = vld [vmem:[#allocation8 + $0x48] sm:$0xff]
    %v167 = vld [vmem:[#allocation8 + $0x50] sm:$0xff]
    %v168 = vld [vmem:[#allocation8 + $0x58] sm:$0xff]
    %v169 = vld [vmem:[#allocation8 + $0x60] sm:$0xff]
    %v170 = vld [vmem:[#allocation8 + $0x68] sm:$0xff]
    %v171 = vld [vmem:[#allocation8 + $0x70] sm:$0xff]
    %v172 = vld [vmem:[#allocation8 + $0x78] sm:$0xff]
    %v173 = vld [vmem:[%s4] sm:$0x1]
    %v175 = vlaneseq
    %v176 = vshrl.u32 %v175, 7
    %v177 = vsub.s32 0, %v176
    %v178 = vrot.slane %v173, %v177
    %180 = vmatprep.subr.mxu0 0.0
    %181 = vmatpush1.msra.mxu0 %v157
    %182 = vmatprep.subr.mxu0 0.0
    %183 = vmatpush1.msra.mxu0 %v158
    %184 = vmatprep.subr.mxu0 0.0
    %185 = vmatpush1.msra.mxu0 %v159
    %186 = vmatprep.subr.mxu0 0.0
    %187 = vmatpush1.msra.mxu0 %v160
    %188 = vmatprep.subr.mxu0 0.0
    %189 = vmatpush1.msra.mxu0 %v161
    %190 = vmatprep.subr.mxu0 0.0
    %191 = vmatpush1.msra.mxu0 %v162
    %192 = vmatprep.subr.mxu0 0.0
    %193 = vmatpush1.msra.mxu0 %v163
    %194 = vmatprep.subr.mxu0 0.0
    %195 = vmatpush1.msra.mxu0 %v164
    %196 = vmatprep.subr.mxu0 0.0
    %197 = vmatpush1.msra.mxu0 %v165
    %198 = vmatprep.subr.mxu0 0.0
    %199 = vmatpush1.msra.mxu0 %v166
    %200 = vmatprep.subr.mxu0 0.0
    %201 = vmatpush1.msra.mxu0 %v167
    %202 = vmatprep.subr.mxu0 0.0
    %203 = vmatpush1.msra.mxu0 %v168
    %204 = vmatprep.subr.mxu0 0.0
    %205 = vmatpush1.msra.mxu0 %v169
    %206 = vmatprep.subr.mxu0 0.0
    %207 = vmatpush1.msra.mxu0 %v170
    %208 = vmatprep.subr.mxu0 0.0
    %209 = vmatpush1.msra.mxu0 %v171
    %210 = vmatprep.subr.mxu0 0.0
    %211 = vmatpush1.msra.mxu0 %v172
    %212 = vmatprep.subr.mxu0 0.0
    %213 = vmatpush1.msra.mxu0 0.0
    %214 = vmatprep.subr.mxu0 0.0
    %215 = vmatpush1.msra.mxu0 0.0
    %216 = vmatprep.subr.mxu0 0.0
    %217 = vmatpush1.msra.mxu0 0.0
    %218 = vmatprep.subr.mxu0 0.0
    %219 = vmatpush1.msra.mxu0 0.0
    %220 = vmatprep.subr.mxu0 0.0
    %221 = vmatpush1.msra.mxu0 0.0
    %222 = vmatprep.subr.mxu0 0.0
    %223 = vmatpush1.msra.mxu0 0.0
    %224 = vmatprep.subr.mxu0 0.0
    %225 = vmatpush1.msra.mxu0 0.0
    %226 = vmatprep.subr.mxu0 0.0
    %227 = vmatpush1.msra.mxu0 0.0
    %228 = vmatprep.subr.mxu0 0.0
    %229 = vmatpush1.msra.mxu0 0.0
    %230 = vmatprep.subr.mxu0 0.0
    %231 = vmatpush1.msra.mxu0 0.0
    %232 = vmatprep.subr.mxu0 0.0
    %233 = vmatpush1.msra.mxu0 0.0
    %234 = vmatprep.subr.mxu0 0.0
    %235 = vmatpush1.msra.mxu0 0.0
    %236 = vmatprep.subr.mxu0 0.0
    %237 = vmatpush1.msra.mxu0 0.0
    %238 = vmatprep.subr.mxu0 0.0
    %239 = vmatpush1.msra.mxu0 0.0
    %240 = vmatprep.subr.mxu0 0.0
    %241 = vmatpush1.msra.mxu0 0.0
    %242 = vmatprep.subr.mxu0 0.0
    %243 = vmatpush1.msra.mxu0 0.0
    %244 = vmatprep.mubr.f32.mxu0 0.0
    %245 = vmatmul.mubr.f32.gmra.mrb[0].mxu0 %v156
    %v246 = vpop.f32.mrb[0].mxu0
    %v247 = vadd.f32 %v178, %v246
    %v248 = vpop.f32.mrb[0].mxu0
    %249 = vdwg.mxu0
    %v250 = vmax.f32 %v247, 0.0
    %v251 = vld [vmem:[%s5] sm:$0x1]
    %v253 = vlaneseq
    %v254 = vshrl.u32 %v253, 7
    %v255 = vsub.s32 0, %v254
    %v256 = vrot.slane %v251, %v255
    %v258 = vmul.f32 %v250, %v256
    %259 = vadd.xlane.f32.xlu0 %v258
    %v260 = vpop.xlane.xlu0 %259
    %261 = vxpose.xlu0.b32.start [1/16] %v260, 128
    %262 = vxpose.xlu0.b32.cont [2/16] 0.0, 128
    %263 = vxpose.xlu0.b32.cont [3/16] 0.0, 128
    %264 = vxpose.xlu0.b32.cont [4/16] 0.0, 128
    %265 = vxpose.xlu0.b32.cont [5/16] 0.0, 128
    %266 = vxpose.xlu0.b32.cont [6/16] 0.0, 128
    %267 = vxpose.xlu0.b32.cont [7/16] 0.0, 128
    %268 = vxpose.xlu0.b32.cont [8/16] 0.0, 128
    %269 = vxpose.xlu0.b32.cont [9/16] 0.0, 128
    %270 = vxpose.xlu0.b32.cont [10/16] 0.0, 128
    %271 = vxpose.xlu0.b32.cont [11/16] 0.0, 128
    %272 = vxpose.xlu0.b32.cont [12/16] 0.0, 128
    %273 = vxpose.xlu0.b32.cont [13/16] 0.0, 128
    %274 = vxpose.xlu0.b32.cont [14/16] 0.0, 128
    %275 = vxpose.xlu0.b32.cont [15/16] 0.0, 128
    %276 = vxpose.xlu0.b32.end [16/16] 0.0, 128
    %v277 = vpop.trf.xlu0
    %v278 = vpop.trf.xlu0
    %v279 = vpop.trf.xlu0
    %v280 = vpop.trf.xlu0
    %v281 = vpop.trf.xlu0
    %v282 = vpop.trf.xlu0
    %v283 = vpop.trf.xlu0
    %v284 = vpop.trf.xlu0
    %v285 = vpop.trf.xlu0
    %v286 = vpop.trf.xlu0
    %v287 = vpop.trf.xlu0
    %v288 = vpop.trf.xlu0
    %v289 = vpop.trf.xlu0
    %v290 = vpop.trf.xlu0
    %v291 = vpop.trf.xlu0
    %v292 = vpop.trf.xlu0
    %v293 = vld [vmem:[#allocation2] sm:$0x1]
    %295 = vset.pattern.permute.xlu0 0
    %296 = vperm.xlu0 %295, %v293
    %v297 = vpop.permute.xlu0 %296
    %v299 = vlaneseq
    %v300 = vshrl.u32 %v299, 7
    %v301 = vsub.s32 0, %v300
    %v302 = vrot.slane %v297, %v301
    %v303 = vadd.f32 %v277, %v302
    %v304 = vlaneseq
    %v305 = vshrl.u32 %v304, 7
    %v306 = vsub.s32 0, %v305
    %v307 = vrot.slane %v303, %v306
    %vm308 = vcmask 64512
    %309 = vst.msk [vmem:[#allocation9] sm:$0xff] %vm308, %v307
    // Predicated region
    $region42: #{tpu_custom_call.1} parent=1 // pred_check
      _
    $region43: #{tpu_custom_call.1} parent=1 // pred_check_branch
      %311 = sbr.rel (0) target = $region45
    $region44: #{tpu_custom_call.1} parent=1 // pred_region
      %s313 = ssub.s32 128, 128
      %314 = vsyncadd [#allocation5], %s313
      %s316 = sshll.u32 [#allocation9], 4
      %s317 = int_to_ptr.vmem [resolvable:$true] %s316
      %319 = dma.vmem_to_hbm [thread:$0]  %s317, 128, %s7, [#allocation5]
    $region45: #{tpu_custom_call.1} parent=1 // pred_fallthru
      _
    // Predicated region
    $region46: #{tpu_custom_call.1} parent=1 // pred_check
      _
    $region47: #{tpu_custom_call.1} parent=1 // pred_check_branch
      %321 = sbr.rel (0) target = $region49
    $region48: #{tpu_custom_call.1} parent=1 // pred_region
      %322 = dma.done [#allocation5], 128
    $region49: #{tpu_custom_call.1} parent=1 // pred_fallthru
      _
    %323 = vsyncpa [#allocation4], 1
    %324 = vsyncpa [#allocation7], 1
    %325 = vsyncpa [#allocation5], 1

// kernel: tpu_custom_call.1
$region0: #{tpu_custom_call.1}
  #allocation0 [shape = 'u32[]', space=smem, size = 0x4, offset = 0x4, fixed_abs, tag = 'smem constant byte address 0x4 - core index']
  #allocation1 [shape = 'u32[144,128]{1,0:T(1,128)}', space=vmem, size = 0x12000, scoped, tag = 'internal scratch']
  #allocation2 [shape = 'f32[1,1]{1,0:T(1,128)S(1)}', space=vmem, size = 0x200, scoped, tag = 'scoped memory for tpu_custom_call.1']
  %s0 = inlined_call_operand.hbm [shape: f32[8,12], index: 0, kind: input, shape index: {}]
  %s1 = inlined_call_operand.hbm [shape: f32[12,128], index: 1, kind: input, shape index: {}]
  %s2 = inlined_call_operand.vmem [shape: f32[1,128], index: 2, kind: input, shape index: {}]
  %s3 = inlined_call_operand.hbm [shape: f32[128,128], index: 3, kind: input, shape index: {}]
  %s4 = inlined_call_operand.vmem [shape: f32[1,128], index: 4, kind: input, shape index: {}]
  %s5 = inlined_call_operand.vmem [shape: f32[1,128], index: 5, kind: input, shape index: {}]
  %s6 = inlined_call_operand.<no memory space> [shape: f32[1,1], index: 6, kind: input, shape index: {}]
  %s7 = inlined_call_operand.hbm [shape: f32[8,8], index: 7, kind: output, shape index: {}]
  %s8 = sld [smem:[#allocation0]]
  $region50: #{tpu_custom_call.1} parent=0
    _
  %s10 = ssub.s32 1, %s8
  %s11 = scalar_select 0, %s10, %s8
  %v12 = vstv %s6
  %13 = vst [vmem:[#allocation2] sm:$0x1] %v12
  $region1: #{tpu_custom_call.1} parent=0
    #allocation3 [shape = 'u8[4096]{0}', space=vmem, size = 0x1000, scoped, tag = 'input window, operand 0, single buffered']
    #allocation4 [shape = 's32[1]{0}', space=sflag, size = 0x4, scoped, tag = 'scoped memory for tpu_custom_call.1']
    #allocation5 [shape = 's32[1]{0}', space=sflag, size = 0x4, scoped, tag = 'scoped memory for tpu_custom_call.1']
    #allocation6 [shape = 'u8[8192]{0}', space=vmem, size = 0x2000, scoped, tag = 'input window, operand 1, single buffered']
    #allocation7 [shape = 's32[1]{0}', space=sflag, size = 0x4, scoped, tag = 'scoped memory for tpu_custom_call.1']
    #allocation8 [shape = 'u8[65536]{0}', space=vmem, size = 0x10000, scoped, tag = 'input window, operand 3, single buffered']
    #allocation9 [shape = 'u8[4096]{0}', space=vmem, size = 0x1000, scoped, tag = 'output window, operand 0, single buffered']
    %14 = vsyncpa [#allocation4], 0
    %15 = vsyncpa [#allocation7], 0
    %16 = vsyncpa [#allocation5], 0
    // Predicated region
    $region2: #{tpu_custom_call.1} parent=1 // pred_check
      _
    $region3: #{tpu_custom_call.1} parent=1 // pred_check_branch
      %18 = sbr.rel (0) target = $region5
    $region4: #{tpu_custom_call.1} parent=1 // pred_region
      %s20 = ssub.s32 128, 128
      %21 = vsyncadd [#allocation4], %s20
      %s23 = sshll.u32 [#allocation3], 4
      %s24 = int_to_ptr.vmem [resolvable:$true] %s23
      %26 = dma.hbm_to_vmem [thread:$0]  %s0, 128, %s24, [#allocation4]
    $region5: #{tpu_custom_call.1} parent=1 // pred_fallthru
      _
    // Predicated region
    $region6: #{tpu_custom_call.1} parent=1 // pred_check
      _
    $region7: #{tpu_custom_call.1} parent=1 // pred_check_branch
      %28 = sbr.rel (0) target = $region9
    $region8: #{tpu_custom_call.1} parent=1 // pred_region
      %s30 = ssub.s32 256, 256
      %31 = vsyncadd [#allocation7], %s30
      %s32 = sshll.u32 [#allocation6], 4
      %s33 = int_to_ptr.vmem [resolvable:$true] %s32
      %38 = dma.hbm_to_vmem [thread:$0]  %s1, 256, %s33, [#allocation7], 128, 128, 8
    $region9: #{tpu_custom_call.1} parent=1 // pred_fallthru
      _
    // Predicated region
    $region10: #{tpu_custom_call.1} parent=1 // pred_check
      _
    $region11: #{tpu_custom_call.1} parent=1 // pred_check_branch
      %40 = sbr.rel (0) target = $region13
    $region12: #{tpu_custom_call.1} parent=1 // pred_region
      _
    $region13: #{tpu_custom_call.1} parent=1 // pred_fallthru
      _
    // Predicated region
    $region14: #{tpu_custom_call.1} parent=1 // pred_check
      _
    $region15: #{tpu_custom_call.1} parent=1 // pred_check_branch
      %42 = sbr.rel (0) target = $region17
    $region16: #{tpu_custom_call.1} parent=1 // pred_region
      %s44 = ssub.s32 2048, 2048
      %45 = vsyncadd [#allocation7], %s44
      %s46 = sshll.u32 [#allocation8], 4
      %s47 = int_to_ptr.vmem [resolvable:$true] %s46
      %52 = dma.hbm_to_vmem [thread:$0]  %s3, 2048, %s47, [#allocation7], 128, 128, 8
    $region17: #{tpu_custom_call.1} parent=1 // pred_fallthru
      _
    // Predicated region
    $region18: #{tpu_custom_call.1} parent=1 // pred_check
      _
    $region19: #{tpu_custom_call.1} parent=1 // pred_check_branch
      %54 = sbr.rel (0) target = $region21
    $region20: #{tpu_custom_call.1} parent=1 // pred_region
      _
    $region21: #{tpu_custom_call.1} parent=1 // pred_fallthru
      _
    // Predicated region
    $region22: #{tpu_custom_call.1} parent=1 // pred_check
      _
    $region23: #{tpu_custom_call.1} parent=1 // pred_check_branch
      %56 = sbr.rel (0) target = $region25
    $region24: #{tpu_custom_call.1} parent=1 // pred_region
      _
    $region25: #{tpu_custom_call.1} parent=1 // pred_fallthru
      _
    // Predicated region
    $region26: #{tpu_custom_call.1} parent=1 // pred_check
      _
    $region27: #{tpu_custom_call.1} parent=1 // pred_check_branch
      %58 = sbr.rel (0) target = $region29
    $region28: #{tpu_custom_call.1} parent=1 // pred_region
      _
    $region29: #{tpu_custom_call.1} parent=1 // pred_fallthru
      _
    // Predicated region
    $region30: #{tpu_custom_call.1} parent=1 // pred_check
      _
    $region31: #{tpu_custom_call.1} parent=1 // pred_check_branch
      %60 = sbr.rel (0) target = $region33
    $region32: #{tpu_custom_call.1} parent=1 // pred_region
      %61 = dma.done [#allocation4], 128
    $region33: #{tpu_custom_call.1} parent=1 // pred_fallthru
      _
    // Predicated region
    $region34: #{tpu_custom_call.1} parent=1 // pred_check
      _
    $region35: #{tpu_custom_call.1} parent=1 // pred_check_branch
      %63 = sbr.rel (0) target = $region37
    $region36: #{tpu_custom_call.1} parent=1 // pred_region
      %64 = dma.done [#allocation7], 256
    $region37: #{tpu_custom_call.1} parent=1 // pred_fallthru
      _
    // Predicated region
    $region38: #{tpu_custom_call.1} parent=1 // pred_check
      _
    $region39: #{tpu_custom_call.1} parent=1 // pred_check_branch
      %66 = sbr.rel (0) target = $region41
    $region40: #{tpu_custom_call.1} parent=1 // pred_region
      %67 = dma.done [#allocation7], 2048
    $region41: #{tpu_custom_call.1} parent=1 // pred_fallthru
      _
    %v68 = vld [vmem:[#allocation3] sm:$0xff]
    %v69 = vld [vmem:[#allocation6] sm:$0xff]
    %v70 = vld [vmem:[#allocation6 + $0x8] sm:$0xf]
    %v71 = vld [vmem:[%s2] sm:$0x1]
    %v73 = vlaneseq
    %v74 = vshrl.u32 %v73, 7
    %v75 = vsub.s32 0, %v74
    %v76 = vrot.slane %v71, %v75
    %vm78 = vcmask 97280
    %v80 = vsel %vm78, %v68, 0
    %vm82 = vcmask 1043456
    %v84 = vsel %vm82, %v70, 0
    %86 = vmatprep.subr.mxu0 0.0
    %87 = vmatpush1.msra.mxu0 %v69
    %88 = vmatprep.subr.mxu0 0.0
    %89 = vmatpush1.msra.mxu0 %v84
    %90 = vmatprep.subr.mxu0 0.0
    %91 = vmatpush1.msra.mxu0 0.0
    %92 = vmatprep.subr.mxu0 0.0
    %93 = vmatpush1.msra.mxu0 0.0
    %94 = vmatprep.subr.mxu0 0.0
    %95 = vmatpush1.msra.mxu0 0.0
    %96 = vmatprep.subr.mxu0 0.0
    %97 = vmatpush1.msra.mxu0 0.0
    %98 = vmatprep.subr.mxu0 0.0
    %99 = vmatpush1.msra.mxu0 0.0
    %100 = vmatprep.subr.mxu0 0.0
    %101 = vmatpush1.msra.mxu0 0.0
    %102 = vmatprep.subr.mxu0 0.0
    %103 = vmatpush1.msra.mxu0 0.0
    %104 = vmatprep.subr.mxu0 0.0
    %105 = vmatpush1.msra.mxu0 0.0
    %106 = vmatprep.subr.mxu0 0.0
    %107 = vmatpush1.msra.mxu0 0.0
    %108 = vmatprep.subr.mxu0 0.0
    %109 = vmatpush1.msra.mxu0 0.0
    %110 = vmatprep.subr.mxu0 0.0
    %111 = vmatpush1.msra.mxu0 0.0
    %112 = vmatprep.subr.mxu0 0.0
    %113 = vmatpush1.msra.mxu0 0.0
    %114 = vmatprep.subr.mxu0 0.0
    %115 = vmatpush1.msra.mxu0 0.0
    %116 = vmatprep.subr.mxu0 0.0
    %117 = vmatpush1.msra.mxu0 0.0
    %118 = vmatprep.subr.mxu0 0.0
    %119 = vmatpush1.msra.mxu0 0.0
    %120 = vmatprep.subr.mxu0 0.0
    %121 = vmatpush1.msra.mxu0 0.0
    %122 = vmatprep.subr.mxu0 0.0
    %123 = vmatpush1.msra.mxu0 0.0
    %124 = vmatprep.subr.mxu0 0.0
    %125 = vmatpush1.msra.mxu0 0.0
    %126 = vmatprep.subr.mxu0 0.0
    %127 = vmatpush1.msra.mxu0 0.0
    %128 = vmatprep.subr.mxu0 0.0
    %129 = vmatpush1.msra.mxu0 0.0
    %130 = vmatprep.subr.mxu0 0.0
    %131 = vmatpush1.msra.mxu0 0.0
    %132 = vmatprep.subr.mxu0 0.0
    %133 = vmatpush1.msra.mxu0 0.0
    %134 = vmatprep.subr.mxu0 0.0
    %135 = vmatpush1.msra.mxu0 0.0
    %136 = vmatprep.subr.mxu0 0.0
    %137 = vmatpush1.msra.mxu0 0.0
    %138 = vmatprep.subr.mxu0 0.0
    %139 = vmatpush1.msra.mxu0 0.0
    %140 = vmatprep.subr.mxu0 0.0
    %141 = vmatpush1.msra.mxu0 0.0
    %142 = vmatprep.subr.mxu0 0.0
    %143 = vmatpush1.msra.mxu0 0.0
    %144 = vmatprep.subr.mxu0 0.0
    %145 = vmatpush1.msra.mxu0 0.0
    %146 = vmatprep.subr.mxu0 0.0
    %147 = vmatpush1.msra.mxu0 0.0
    %148 = vmatprep.subr.mxu0 0.0
    %149 = vmatpush1.msra.mxu0 0.0
    %150 = vmatprep.mubr.f32.mxu0 0.0
    %151 = vmatmul.mubr.f32.gmra.mrb[0].mxu0 %v80
    %v152 = vpop.f32.mrb[0].mxu0
    %v153 = vadd.f32 %v76, %v152
    %v154 = vpop.f32.mrb[0].mxu0
    %155 = vdwg.mxu0
    %v156 = vmax.f32 %v153, 0.0
    %v157 = vld [vmem:[#allocation8] sm:$0xff]
    %v158 = vld [vmem:[#allocation8 + $0x8] sm:$0xff]
    %v159 = vld [vmem:[#allocation8 + $0x10] sm:$0xff]
    %v160 = vld [vmem:[#allocation8 + $0x18] sm:$0xff]
    %v161 = vld [vmem:[#allocation8 + $0x20] sm:$0xff]
    %v162 = vld [vmem:[#allocation8 + $0x28] sm:$0xff]
    %v163 = vld [vmem:[#allocation8 + $0x30] sm:$0xff]
    %v164 = vld [vmem:[#allocation8 + $0x38] sm:$0xff]
    %v165 = vld [vmem:[#allocation8 + $0x40] sm:$0xff]
    %v166 = vld [vmem:[#allocation8 + $0x48] sm:$0xff]
    %v167 = vld [vmem:[#allocation8 + $0x50] sm:$0xff]
    %v168 = vld [vmem:[#allocation8 + $0x58] sm:$0xff]
    %v169 = vld [vmem:[#allocation8 + $0x60] sm:$0xff]
    %v170 = vld [vmem:[#allocation8 + $0x68] sm:$0xff]
    %v171 = vld [vmem:[#allocation8 + $0x70] sm:$0xff]
    %v172 = vld [vmem:[#allocation8 + $0x78] sm:$0xff]
    %v173 = vld [vmem:[%s4] sm:$0x1]
    %v175 = vlaneseq
    %v176 = vshrl.u32 %v175, 7
    %v177 = vsub.s32 0, %v176
    %v178 = vrot.slane %v173, %v177
    %180 = vmatprep.subr.mxu0 0.0
    %181 = vmatpush1.msra.mxu0 %v157
    %182 = vmatprep.subr.mxu0 0.0
    %183 = vmatpush1.msra.mxu0 %v158
    %184 = vmatprep.subr.mxu0 0.0
    %185 = vmatpush1.msra.mxu0 %v159
    %186 = vmatprep.subr.mxu0 0.0
    %187 = vmatpush1.msra.mxu0 %v160
    %188 = vmatprep.subr.mxu0 0.0
    %189 = vmatpush1.msra.mxu0 %v161
    %190 = vmatprep.subr.mxu0 0.0
    %191 = vmatpush1.msra.mxu0 %v162
    %192 = vmatprep.subr.mxu0 0.0
    %193 = vmatpush1.msra.mxu0 %v163
    %194 = vmatprep.subr.mxu0 0.0
    %195 = vmatpush1.msra.mxu0 %v164
    %196 = vmatprep.subr.mxu0 0.0
    %197 = vmatpush1.msra.mxu0 %v165
    %198 = vmatprep.subr.mxu0 0.0
    %199 = vmatpush1.msra.mxu0 %v166
    %200 = vmatprep.subr.mxu0 0.0
    %201 = vmatpush1.msra.mxu0 %v167
    %202 = vmatprep.subr.mxu0 0.0
    %203 = vmatpush1.msra.mxu0 %v168
    %204 = vmatprep.subr.mxu0 0.0
    %205 = vmatpush1.msra.mxu0 %v169
    %206 = vmatprep.subr.mxu0 0.0
    %207 = vmatpush1.msra.mxu0 %v170
    %208 = vmatprep.subr.mxu0 0.0
    %209 = vmatpush1.msra.mxu0 %v171
    %210 = vmatprep.subr.mxu0 0.0
    %211 = vmatpush1.msra.mxu0 %v172
    %212 = vmatprep.subr.mxu0 0.0
    %213 = vmatpush1.msra.mxu0 0.0
    %214 = vmatprep.subr.mxu0 0.0
    %215 = vmatpush1.msra.mxu0 0.0
    %216 = vmatprep.subr.mxu0 0.0
    %217 = vmatpush1.msra.mxu0 0.0
    %218 = vmatprep.subr.mxu0 0.0
    %219 = vmatpush1.msra.mxu0 0.0
    %220 = vmatprep.subr.mxu0 0.0
    %221 = vmatpush1.msra.mxu0 0.0
    %222 = vmatprep.subr.mxu0 0.0
    %223 = vmatpush1.msra.mxu0 0.0
    %224 = vmatprep.subr.mxu0 0.0
    %225 = vmatpush1.msra.mxu0 0.0
    %226 = vmatprep.subr.mxu0 0.0
    %227 = vmatpush1.msra.mxu0 0.0
    %228 = vmatprep.subr.mxu0 0.0
    %229 = vmatpush1.msra.mxu0 0.0
    %230 = vmatprep.subr.mxu0 0.0
    %231 = vmatpush1.msra.mxu0 0.0
    %232 = vmatprep.subr.mxu0 0.0
    %233 = vmatpush1.msra.mxu0 0.0
    %234 = vmatprep.subr.mxu0 0.0
    %235 = vmatpush1.msra.mxu0 0.0
    %236 = vmatprep.subr.mxu0 0.0
    %237 = vmatpush1.msra.mxu0 0.0
    %238 = vmatprep.subr.mxu0 0.0
    %239 = vmatpush1.msra.mxu0 0.0
    %240 = vmatprep.subr.mxu0 0.0
    %241 = vmatpush1.msra.mxu0 0.0
    %242 = vmatprep.subr.mxu0 0.0
    %243 = vmatpush1.msra.mxu0 0.0
    %244 = vmatprep.mubr.f32.mxu0 0.0
    %245 = vmatmul.mubr.f32.gmra.mrb[0].mxu0 %v156
    %v246 = vpop.f32.mrb[0].mxu0
    %v247 = vadd.f32 %v178, %v246
    %v248 = vpop.f32.mrb[0].mxu0
    %249 = vdwg.mxu0
    %v250 = vmax.f32 %v247, 0.0
    %v251 = vld [vmem:[%s5] sm:$0x1]
    %v253 = vlaneseq
    %v254 = vshrl.u32 %v253, 7
    %v255 = vsub.s32 0, %v254
    %v256 = vrot.slane %v251, %v255
    %v258 = vmul.f32 %v250, %v256
    %259 = vadd.xlane.f32.xlu0 %v258
    %v260 = vpop.xlane.xlu0 %259
    %261 = vxpose.xlu0.b32.start [1/16] %v260, 128
    %262 = vxpose.xlu0.b32.cont [2/16] 0.0, 128
    %263 = vxpose.xlu0.b32.cont [3/16] 0.0, 128
    %264 = vxpose.xlu0.b32.cont [4/16] 0.0, 128
    %265 = vxpose.xlu0.b32.cont [5/16] 0.0, 128
    %266 = vxpose.xlu0.b32.cont [6/16] 0.0, 128
    %267 = vxpose.xlu0.b32.cont [7/16] 0.0, 128
    %268 = vxpose.xlu0.b32.cont [8/16] 0.0, 128
    %269 = vxpose.xlu0.b32.cont [9/16] 0.0, 128
    %270 = vxpose.xlu0.b32.cont [10/16] 0.0, 128
    %271 = vxpose.xlu0.b32.cont [11/16] 0.0, 128
    %272 = vxpose.xlu0.b32.cont [12/16] 0.0, 128
    %273 = vxpose.xlu0.b32.cont [13/16] 0.0, 128
    %274 = vxpose.xlu0.b32.cont [14/16] 0.0, 128
    %275 = vxpose.xlu0.b32.cont [15/16] 0.0, 128
    %276 = vxpose.xlu0.b32.end [16/16] 0.0, 128
    %v277 = vpop.trf.xlu0
    %v278 = vpop.trf.xlu0
    %v279 = vpop.trf.xlu0
    %v280 = vpop.trf.xlu0
    %v281 = vpop.trf.xlu0
    %v282 = vpop.trf.xlu0
    %v283 = vpop.trf.xlu0
    %v284 = vpop.trf.xlu0
    %v285 = vpop.trf.xlu0
    %v286 = vpop.trf.xlu0
    %v287 = vpop.trf.xlu0
    %v288 = vpop.trf.xlu0
    %v289 = vpop.trf.xlu0
    %v290 = vpop.trf.xlu0
    %v291 = vpop.trf.xlu0
    %v292 = vpop.trf.xlu0
    %v293 = vld [vmem:[#allocation2] sm:$0x1]
    %295 = vset.pattern.permute.xlu0 0
    %296 = vperm.xlu0 %295, %v293
    %v297 = vpop.permute.xlu0 %296
    %v299 = vlaneseq
    %v300 = vshrl.u32 %v299, 7
    %v301 = vsub.s32 0, %v300
    %v302 = vrot.slane %v297, %v301
    %v303 = vadd.f32 %v277, %v302
    %v304 = vlaneseq
    %v305 = vshrl.u32 %v304, 7
    %v306 = vsub.s32 0, %v305
    %v307 = vrot.slane %v303, %v306
    %vm308 = vcmask 64512
    %309 = vst.msk [vmem:[#allocation9] sm:$0xff] %vm308, %v307
    // Predicated region
    $region42: #{tpu_custom_call.1} parent=1 // pred_check
      _
    $region43: #{tpu_custom_call.1} parent=1 // pred_check_branch
      %311 = sbr.rel (0) target = $region45
    $region44: #{tpu_custom_call.1} parent=1 // pred_region
      %s313 = ssub.s32 128, 128
      %314 = vsyncadd [#allocation5], %s313
      %s316 = sshll.u32 [#allocation9], 4
      %s317 = int_to_ptr.vmem [resolvable:$true] %s316
      %319 = dma.vmem_to_hbm [thread:$0]  %s317, 128, %s7, [#allocation5]
    $region45: #{tpu_custom_call.1} parent=1 // pred_fallthru
      _
    // Predicated region
    $region46: #{tpu_custom_call.1} parent=1 // pred_check
      _
    $region47: #{tpu_custom_call.1} parent=1 // pred_check_branch
      %321 = sbr.rel (0) target = $region49
    $region48: #{tpu_custom_call.1} parent=1 // pred_region
      %322 = dma.done [#allocation5], 128
    $region49: #{tpu_custom_call.1} parent=1 // pred_fallthru
      _
    %323 = vsyncpa [#allocation4], 1
    %324 = vsyncpa [#allocation7], 1
    %325 = vsyncpa [#allocation5], 1

</llo_original>
